<compile_context>
chip_gen: v5e
topology: v5e:2x2
jax: 0.10.0
libtpu: 0.0.40
codegen_flags: <defaults>
</compile_context>

<pallas_src>
import jax
import jax.numpy as jnp
from jax.experimental import pallas as pl
from jax.experimental.pallas import tpu as pltpu

_LANES = 128          # vreg lane width
_TB = 512             # rows per block in the lane-dense path (multiple of 8/16/32)


def _copy_kernel(x_ref, o_ref):
    # Pure pass-through: copy the current tile from input to output.
    o_ref[...] = x_ref[...]


def vector_encoder_forward(x: jax.Array, use_pallas: bool = True) -> jax.Array:
    """Pallas implementation of VectorEncoder.forward (identity).

    Args:
      x: (batch, obs_dim) array.
      use_pallas: if False, take the zero-cost path and just return x
        (recommended for production; identity needs no kernel).
    Returns:
      Array identical to x (same shape, dtype, values).
    """
    assert x.ndim == 2, "expected (batch, obs_dim) vector observations"
    if not use_pallas:
        # Fastest option per perf review: identity, no kernel launch.
        return x

    B, D = x.shape
    total = B * D

    if total % _LANES == 0:
        # Lane-dense path: view the contiguous buffer as (rows, 128) so stores
        # use full vreg lanes, and tile the row axis for pipelining.
        rows = total // _LANES
        x2 = x.reshape(rows, _LANES)

        if rows <= _TB:
            tb = rows                      # single full block (always legal)
        else:
            tb = _TB                       # 512 rows: multiple of 8/16/32

        out = pl.pallas_call(
            _copy_kernel,
            out_shape=jax.ShapeDtypeStruct((rows, _LANES), x.dtype),
            grid=(pl.cdiv(rows, tb),),
            in_specs=[pl.BlockSpec((tb, _LANES), lambda i: (i, 0))],
            out_specs=pl.BlockSpec((tb, _LANES), lambda i: (i, 0)),
            input_output_aliases={0: 0},   # alias output onto input buffer
            compiler_params=pltpu.CompilerParams(
                dimension_semantics=("parallel",),  # shard rows across TCs on v7x
            ),
        )(x2)
        return out.reshape(B, D)

    # Small / ragged fallback: one full-array block (block_shape == array dims
    # satisfies the (8,128) rule for any dtype), still aliased in-place.
    return pl.pallas_call(
        _copy_kernel,
        out_shape=jax.ShapeDtypeStruct((B, D), x.dtype),
        grid=(1,),
        in_specs=[pl.BlockSpec((B, D), lambda i: (0, 0))],
        out_specs=pl.BlockSpec((B, D), lambda i: (0, 0)),
        input_output_aliases={0: 0},
    )(x)


class VectorEncoder:
    """JAX/Pallas port of the PyTorch VectorEncoder (pass-through encoder)."""

    def __init__(self, obs_shape, use_pallas: bool = True):
        self.output_size = obs_shape[0]
        self.use_pallas = use_pallas

    def __call__(self, x):
        return vector_encoder_forward(x, use_pallas=self.use_pallas)


if __name__ == "__main__":
    key = jax.random.PRNGKey(0)

    # Primary small case (ragged: B*D = 64, not a multiple of 128 -> fallback path).
    batch, obs_dim = 2, 32
    x = jax.random.normal(key, (batch, obs_dim), dtype=jnp.float32)

    enc = VectorEncoder(obs_shape=(obs_dim,))
    y = jax.block_until_ready(enc(x))
    assert y.shape == x.shape and y.dtype == x.dtype
    assert bool(jnp.all(y == x))
    assert enc.output_size == obs_dim

    # Second case exercising the lane-dense, batch-tiled, pipelined path
    # (2048*32 = 65536 elems -> 512 rows x 128 lanes, multiple grid-worthy rows).
    key2 = jax.random.PRNGKey(0)
    x_big = jax.random.normal(key2, (2048, obs_dim), dtype=jnp.float32)
    y_big = jax.block_until_ready(enc(x_big))
    assert y_big.shape == x_big.shape and y_big.dtype == x_big.dtype
    assert bool(jnp.all(y_big == x_big))

    # Zero-cost production path (no kernel launch at all).
    y_fast = jax.block_until_ready(vector_encoder_forward(x, use_pallas=False))
    assert bool(jnp.all(y_fast == x))

    print("KERNEL_OK")
</pallas_src>

<mosaic_0001>
module attributes {stable_mosaic.version = 11 : i64} {
  func.func @_copy_kernel(%arg0: i32, %arg1: memref<2x32xf32, #tpu.memory_space<vmem>>, %arg2: memref<2x32xf32, #tpu.memory_space<vmem>>) attributes {dimension_semantics = [#tpu.dimension_semantics<arbitrary>], iteration_bounds = array<i64: 1>, scalar_prefetch = 0 : i64, scratch_operands = 0 : i64, tpu.core_type = #tpu.core_type<tc>, window_params = [{pipeline_mode = #tpu.pipeline_mode<synchronous>, transform_indices = @transform_0, window_bounds = array<i64: 2, 32>}, {pipeline_mode = #tpu.pipeline_mode<synchronous>, transform_indices = @transform_1, window_bounds = array<i64: 2, 32>}]} {
    %c0 = arith.constant 0 : index
    %c0_0 = arith.constant 0 : index
    %0 = vector.load %arg1[%c0, %c0_0] : memref<2x32xf32, #tpu.memory_space<vmem>>, vector<2x32xf32>
    %c0_1 = arith.constant 0 : index
    %c0_2 = arith.constant 0 : index
    %1 = vector.load %arg2[%c0_1, %c0_2] : memref<2x32xf32, #tpu.memory_space<vmem>>, vector<2x32xf32>
    tpu.vector_store %arg2[%c0_1, %c0_2], %0 {strides = array<i32>} : memref<2x32xf32, #tpu.memory_space<vmem>>, vector<2x32xf32>,
    return
  }
  func.func @transform_0(%arg0: i32) -> (i32, i32) {
    %c0_i32 = arith.constant 0 : i32
    %c0_i32_0 = arith.constant 0 : i32
    %c0_i32_1 = arith.constant 0 : i32
    return %c0_i32, %c0_i32_0 : i32, i32
  }
  func.func @transform_1(%arg0: i32) -> (i32, i32) {
    %c0_i32 = arith.constant 0 : i32
    %c0_i32_0 = arith.constant 0 : i32
    %c0_i32_1 = arith.constant 0 : i32
    return %c0_i32, %c0_i32_0 : i32, i32
  }
}

</mosaic_0001>

<llo_original>
// kernel: tpu_custom_call.1
$region0: #{tpu_custom_call.1}
  #allocation0 [shape = 'u32[]', space=smem, size = 0x4, offset = 0x4, fixed_abs, tag = 'smem constant byte address 0x4 - core index']
  #allocation1 [shape = 'u32[72,128]{1,0:T(1,128)}', space=vmem, size = 0x9000, scoped, tag = 'internal scratch']
  %s0 = inlined_call_operand.hbm [shape: f32[2,32], index: 0, kind: input, shape index: {}, may-alias: {0,1}]
  %s1 = inlined_call_operand.hbm [shape: f32[2,32], index: 1, kind: output, shape index: {}, may-alias: {0,1}]
  %s2 = sld [smem:[#allocation0]]
  $region18: #{tpu_custom_call.1} parent=0
    _
  %s4 = ssub.s32 1, %s2
  %s5 = scalar_select 0, %s4, %s2
  $region1: #{tpu_custom_call.1} parent=0
    #allocation2 [shape = 'u8[1024]{0}', space=vmem, size = 0x400, scoped, tag = 'input window, operand 0, single buffered']
    #allocation3 [shape = 's32[1]{0}', space=sflag, size = 0x4, scoped, tag = 'scoped memory for tpu_custom_call.1']
    #allocation4 [shape = 's32[1]{0}', space=sflag, size = 0x4, scoped, tag = 'scoped memory for tpu_custom_call.1']
    #allocation5 [shape = 'u8[1024]{0}', space=vmem, size = 0x400, scoped, tag = 'output window, operand 0, single buffered']
    %6 = vsyncpa [#allocation3], 0
    %7 = vsyncpa [#allocation4], 0
    // Predicated region
    $region2: #{tpu_custom_call.1} parent=1 // pred_check
      _
    $region3: #{tpu_custom_call.1} parent=1 // pred_check_branch
      %9 = sbr.rel (0) target = $region5
    $region4: #{tpu_custom_call.1} parent=1 // pred_region
      %11 = vsyncadd [#allocation3], 0
      %s13 = sshll.u32 %s0, 4
      %s14 = int_to_ptr.hbm [resolvable:$true] %s13
      %s15 = sshll.u32 [#allocation2], 4
      %s16 = int_to_ptr.vmem [resolvable:$true] %s15
      %18 = dma.hbm_to_vmem [thread:$0]  %s14, 32, %s16, [#allocation3]
    $region5: #{tpu_custom_call.1} parent=1 // pred_fallthru
      _
    // Predicated region
    $region6: #{tpu_custom_call.1} parent=1 // pred_check
      _
    $region7: #{tpu_custom_call.1} parent=1 // pred_check_branch
      %20 = sbr.rel (0) target = $region9
    $region8: #{tpu_custom_call.1} parent=1 // pred_region
      %22 = dma.done [#allocation3], 32
    $region9: #{tpu_custom_call.1} parent=1 // pred_fallthru
      _
    %v23 = vld [vmem:[#allocation2] sm:$0x3]
    %vm24 = vcmask 254976
    %25 = vst.msk [vmem:[#allocation5] sm:$0x3] %vm24, %v23
    // Predicated region
    $region10: #{tpu_custom_call.1} parent=1 // pred_check
      _
    $region11: #{tpu_custom_call.1} parent=1 // pred_check_branch
      %27 = sbr.rel (0) target = $region13
    $region12: #{tpu_custom_call.1} parent=1 // pred_region
      %29 = vsyncadd [#allocation4], 0
      %s31 = sshll.u32 [#allocation5], 4
      %s32 = int_to_ptr.vmem [resolvable:$true] %s31
      %s33 = sshll.u32 %s1, 4
      %s34 = int_to_ptr.hbm [resolvable:$true] %s33
      %36 = dma.vmem_to_hbm [thread:$0]  %s32, 32, %s34, [#allocation4]
    $region13: #{tpu_custom_call.1} parent=1 // pred_fallthru
      _
    // Predicated region
    $region14: #{tpu_custom_call.1} parent=1 // pred_check
      _
    $region15: #{tpu_custom_call.1} parent=1 // pred_check_branch
      %38 = sbr.rel (0) target = $region17
    $region16: #{tpu_custom_call.1} parent=1 // pred_region
      %40 = dma.done [#allocation4], 32
    $region17: #{tpu_custom_call.1} parent=1 // pred_fallthru
      _
    %41 = vsyncpa [#allocation3], 1
    %42 = vsyncpa [#allocation4], 1

</llo_original>
